<compile_context>
chip_gen: v6e
topology: v6e:2x2x1
jax: 0.10.0
libtpu: 0.0.40
codegen_flags: <defaults>
</compile_context>

<pallas_src>
import functools

import jax
import jax.numpy as jnp
from jax.experimental import pallas as pl
from jax.experimental.pallas import tpu as pltpu


def _round_up(a, m):
    return ((a + m - 1) // m) * m


def _compute_tile(xm, xh, w_ref, b_ref, o_ref, *, kernel_size, dilation, out_w):
    """Shared per-tile compute.

    xm : (C, W_in) main input tile (VMEM value), W_in >= out_w.
    xh : (C, TLH) right-halo tile (VMEM value) or None when xm already holds
         the whole receptive field (single-block regime).
    w_ref : (K, C, C) per-tap weights, w_ref[k] == weight[:, :, k].
    b_ref : (C, 1) f32 bias column.
    o_ref : (1, C, out_w) output tile.
    """
    x_cat = None
    if xh is not None and kernel_size > 1:
        # Aligned lane-concat (xm width is a multiple of 128); VMEM-resident.
        x_cat = jnp.concatenate([xm, xh], axis=-1)        # (C, TL + TLH)

    def shifted(s):
        # Columns j -> x[:, j + s]; all offsets are static Python ints.
        if s == 0:
            return xm if xm.shape[-1] == out_w else xm[:, :out_w]
        src = xm if x_cat is None else x_cat
        return src[:, s:s + out_w]

    crop = (dilation * (kernel_size - 1)) // 2
    acc = None
    resid = None
    # K unrolled accumulating dots: no (K*C, TL) stacked im2col buffer.
    for k in range(kernel_size):
        s = k * dilation
        tap = shifted(s)
        part = jnp.dot(w_ref[k], tap, preferred_element_type=jnp.float32)
        acc = part if acc is None else acc + part
        if s == crop:
            resid = tap                                   # reuse the center-tap view
    if resid is None:                                     # even kernel_size
        resid = shifted(crop)

    out = jnp.maximum(acc + b_ref[...], 0.0) + resid.astype(jnp.float32)
    o_ref[0] = out.astype(o_ref.dtype)


def _kernel_single(x_ref, w_ref, b_ref, o_ref, *, kernel_size, dilation, out_w):
    _compute_tile(x_ref[0], None, w_ref, b_ref, o_ref,
                  kernel_size=kernel_size, dilation=dilation, out_w=out_w)


def _kernel_tiled(xm_ref, xh_ref, w_ref, b_ref, o_ref, *, kernel_size, dilation, out_w):
    _compute_tile(xm_ref[0], xh_ref[0], w_ref, b_ref, o_ref,
                  kernel_size=kernel_size, dilation=dilation, out_w=out_w)


def dilated_conv1d(x, weight, bias, *, dilation=1, compute_dtype=None,
                   tile_lanes=1024):
    """relu(conv1d(x, weight, bias, padding='valid', dilation)) + center-crop(x).

    x: (B, C, L); weight: (C, C, K) [out, in, k]; bias: (C,).
    Returns (B, C, L - dilation*(K-1)) in x.dtype.

    compute_dtype: dtype of the MXU inputs (accumulation + epilogue stay f32).
    jnp.bfloat16 is the recommended production setting for f32 inputs.
    """
    B, C, L = x.shape
    assert weight.shape[0] == C and weight.shape[1] == C
    K = weight.shape[-1]
    halo = dilation * (K - 1)
    out_len = L - halo
    assert out_len > 0
    assert halo % 2 == 0, "center crop requires dilation*(K-1) to be even"

    out_dtype = x.dtype
    cdt = jnp.dtype(x.dtype if compute_dtype is None else compute_dtype)
    in_item = cdt.itemsize
    out_item = jnp.dtype(out_dtype).itemsize
    f32 = 4

    # Operand prep: no zero padding / cropping of x.  The only potential copy
    # is the optional dtype cast (bf16 compute path).
    x_c = x if x.dtype == cdt else x.astype(cdt)
    w_taps = jnp.transpose(weight.astype(cdt), (2, 0, 1))      # (K, C, C), tiny
    bias_col = bias.astype(jnp.float32).reshape(C, 1)

    # Physical VMEM (v5e/v6e: 128 MiB, v7x: 64 MiB) with headroom.
    try:
        vmem_cap = int(pltpu.get_tpu_info().vmem_capacity_bytes)
    except Exception:
        vmem_cap = 64 * 1024 * 1024

    tlh = _round_up(max(halo, 1), 128)                          # halo block, lane aligned
    tl = _round_up(max(tile_lanes, 128), tlh)                   # output tile (multiple of tlh)

    def _single_bytes():
        return (2 * C * L * in_item + 2 * C * out_len * out_item
                + 2 * K * C * C * in_item + 2 * C * f32
                + (K - 1) * C * out_len * in_item + 3 * C * out_len * f32)

    # Single-block regime: whole (C, L) row per batch; no halo, no partial blocks.
    use_single = out_len <= 2 * tl
    if use_single and _single_bytes() > max(16 << 20, vmem_cap // 4) and out_len >= 2 * tlh:
        # Row too big for one VMEM tile: fall back to length tiling with >= 2 tiles.
        use_single = False
        tl = max(tlh, (out_len // (2 * tlh)) * tlh)

    if use_single:
        est = _single_bytes()
        vmem_limit = int(max(32 << 20, min(int(est * 1.5) + (4 << 20),
                                           vmem_cap - (8 << 20))))
        kernel = functools.partial(_kernel_single, kernel_size=K,
                                   dilation=dilation, out_w=out_len)
        return pl.pallas_call(
            kernel,
            out_shape=jax.ShapeDtypeStruct((B, C, out_len), out_dtype),
            grid_spec=pltpu.PrefetchScalarGridSpec(
                num_scalar_prefetch=0,
                grid=(B,),
                in_specs=[
                    pl.BlockSpec((1, C, L), lambda b: (b, 0, 0)),
                    pl.BlockSpec((K, C, C), lambda b: (0, 0, 0)),
                    pl.BlockSpec((C, 1), lambda b: (0, 0)),
                ],
                out_specs=pl.BlockSpec((1, C, out_len), lambda b: (b, 0, 0)),
            ),
            compiler_params=pltpu.CompilerParams(
                dimension_semantics=("parallel",),
                vmem_limit_bytes=vmem_limit,
            ),
        )(x_c, w_taps, bias_col)

    # Tiled regime: grid = (B, n_l).  Each step reads an aligned (C, tl) main
    # window plus a (C, tlh) right-halo window (duplicate read <= tlh/tl).
    # Ragged tails use Pallas partial boundary blocks (OOB output writes are
    # dropped; OOB input lanes only feed dropped output columns).  The halo
    # block index is clamped so its start always stays in bounds; the clamp
    # can only fire on steps whose valid outputs never reach the halo
    # ((j+1)*tl >= L), so it never changes a valid result.
    n_l = pl.cdiv(out_len, tl)          # >= 2 by construction (out_len > 2*tl or fallback)
    step = tl // tlh
    max_h = (L - 1) // tlh

    est = (2 * C * tl * in_item + 2 * C * tlh * in_item            # pipelined inputs
           + 2 * K * C * C * in_item + 2 * C * f32                 # weights + bias
           + 2 * C * tl * out_item                                 # pipelined output
           + C * (tl + tlh) * in_item                              # x_cat concat temp
           + (K - 1) * C * tl * in_item                            # per-tap operand relayouts
           + 3 * C * tl * f32)                                     # acc + f32 resid + epilogue
    vmem_limit = int(max(32 << 20, min(int(est * 1.5) + (4 << 20),
                                       vmem_cap - (8 << 20))))

    kernel = functools.partial(_kernel_tiled, kernel_size=K,
                               dilation=dilation, out_w=tl)

    return pl.pallas_call(
        kernel,
        out_shape=jax.ShapeDtypeStruct((B, C, out_len), out_dtype),
        grid_spec=pltpu.PrefetchScalarGridSpec(
            num_scalar_prefetch=0,
            grid=(B, n_l),
            in_specs=[
                # main input tile, aligned with the output tile
                pl.BlockSpec((1, C, tl), lambda b, j: (b, 0, j)),
                # right halo: the tlh columns immediately after the main tile,
                # clamped so the block start stays inside the array
                pl.BlockSpec((1, C, tlh),
                             lambda b, j: (b, 0, jnp.minimum((j + 1) * step, max_h))),
                # per-tap weights (constant across the grid)
                pl.BlockSpec((K, C, C), lambda b, j: (0, 0, 0)),
                # bias column
                pl.BlockSpec((C, 1), lambda b, j: (0, 0)),
            ],
            out_specs=pl.BlockSpec((1, C, tl), lambda b, j: (b, 0, j)),
        ),
        compiler_params=pltpu.CompilerParams(
            # B * n_l >= 2, so both v7x TensorCores get work.
            dimension_semantics=("parallel", "parallel"),
            vmem_limit_bytes=vmem_limit,
        ),
    )(x_c, x_c, w_taps, bias_col)


def _reference(x, weight, bias, dilation):
    # Plain-JAX reference matching PyTorch semantics (full f32 precision).
    out = jax.lax.conv_general_dilated(
        x.astype(jnp.float32), weight.astype(jnp.float32),
        window_strides=(1,), padding="VALID",
        rhs_dilation=(dilation,),
        dimension_numbers=("NCH", "OIH", "NCH"),
        precision=jax.lax.Precision.HIGHEST,
    ) + bias.astype(jnp.float32)[None, :, None]
    crop = (x.shape[-1] - out.shape[-1]) // 2
    resid = x.astype(jnp.float32)[..., crop:crop + out.shape[-1]]
    return jnp.maximum(out, 0.0) + resid


if __name__ == "__main__":
    key = jax.random.PRNGKey(0)

    def _make(k, B, C, L, K):
        kx, kw, kb = jax.random.split(k, 3)
        bound = 1.0 / ((C * K) ** 0.5)
        x = jax.random.normal(kx, (B, C, L), dtype=jnp.float32)
        w = jax.random.uniform(kw, (C, C, K), jnp.float32, -bound, bound)
        b = jax.random.uniform(kb, (C,), jnp.float32, -bound, bound)
        return x, w, b

    k1, k2, k3, key = jax.random.split(key, 4)

    # --- Test 1: module defaults at tiny shapes (single-block regime, f32) ---
    x1, w1, b1 = _make(k1, 2, 8, 16, 3)
    out1 = jax.block_until_ready(dilated_conv1d(x1, w1, b1, dilation=1))
    ref1 = _reference(x1, w1, b1, 1)
    assert out1.shape == ref1.shape
    assert jnp.allclose(out1, ref1, atol=1e-5, rtol=1e-5), \
        float(jnp.max(jnp.abs(out1 - ref1)))

    # --- Test 2: non-multiple-of-8 channels + dilation (single-block regime) -
    x2, w2, b2 = _make(k2, 2, 100, 800, 3)
    out2 = jax.block_until_ready(dilated_conv1d(x2, w2, b2, dilation=2))
    ref2 = _reference(x2, w2, b2, 2)
    assert out2.shape == ref2.shape
    assert jnp.allclose(out2, ref2, atol=1e-4, rtol=1e-4), \
        float(jnp.max(jnp.abs(out2 - ref2)))

    # --- Test 3: length-tiled regime (halo across tiles, ragged last tile) ---
    x3, w3, b3 = _make(k3, 2, 64, 2500, 3)
    out3 = jax.block_until_ready(dilated_conv1d(x3, w3, b3, dilation=2))
    ref3 = _reference(x3, w3, b3, 2)
    assert out3.shape == ref3.shape
    assert jnp.allclose(out3, ref3, atol=1e-4, rtol=1e-4), \
        float(jnp.max(jnp.abs(out3 - ref3)))

    # --- Test 4: bf16 compute path (f32 accumulation/epilogue), tiled regime -
    out4 = jax.block_until_ready(
        dilated_conv1d(x3, w3, b3, dilation=2, compute_dtype=jnp.bfloat16))
    ref4 = _reference(x3.astype(jnp.bfloat16).astype(jnp.float32),
                      w3.astype(jnp.bfloat16).astype(jnp.float32), b3, 2)
    assert out4.shape == ref4.shape
    assert jnp.allclose(out4, ref4, atol=5e-3, rtol=5e-2), \
        float(jnp.max(jnp.abs(out4 - ref4)))

    print("KERNEL_OK")
</pallas_src>

<mosaic_0001>
module attributes {stable_mosaic.version = 11 : i64} {
  func.func @_kernel_single(%arg0: i32, %arg1: memref<1x8x16xf32, #tpu.memory_space<vmem>>, %arg2: memref<3x8x8xf32, #tpu.memory_space<vmem>>, %arg3: memref<8x1xf32, #tpu.memory_space<vmem>>, %arg4: memref<1x8x14xf32, #tpu.memory_space<vmem>>) attributes {dimension_semantics = [#tpu.dimension_semantics<parallel>], iteration_bounds = array<i64: 2>, scalar_prefetch = 0 : i64, scratch_operands = 0 : i64, tpu.core_type = #tpu.core_type<tc>, window_params = [{transform_indices = @transform_0, window_bounds = array<i64: 1, 8, 16>}, {pipeline_mode = #tpu.pipeline_mode<synchronous>, transform_indices = @transform_1, window_bounds = array<i64: 3, 8, 8>}, {pipeline_mode = #tpu.pipeline_mode<synchronous>, transform_indices = @transform_2, window_bounds = array<i64: 8, 1>}, {transform_indices = @transform_3, window_bounds = array<i64: 1, 8, 14>}]} {
    %c0 = arith.constant 0 : index
    %c0_0 = arith.constant 0 : index
    %c0_1 = arith.constant 0 : index
    %0 = vector.load %arg1[%c0, %c0_0, %c0_1] : memref<1x8x16xf32, #tpu.memory_space<vmem>>, vector<1x8x16xf32>
    %1 = vector.shape_cast %0 : vector<1x8x16xf32> to vector<8x16xf32>
    %2 = vector.extract_strided_slice %1 {offsets = [0, 0], sizes = [8, 14], strides = [1, 1]} : vector<8x16xf32> to vector<8x14xf32>
    %c0_2 = arith.constant 0 : index
    %c0_3 = arith.constant 0 : index
    %c0_4 = arith.constant 0 : index
    %3 = vector.load %arg2[%c0_2, %c0_3, %c0_4] : memref<3x8x8xf32, #tpu.memory_space<vmem>>, vector<1x8x8xf32>
    %4 = vector.shape_cast %3 : vector<1x8x8xf32> to vector<8x8xf32>
    %cst = arith.constant dense<0.000000e+00> : vector<8x14xf32>
    %5 = tpu.matmul %4, %2, %cst {dimension_numbers = #tpu.dot_dimension_numbers<[1], [0], [0], [1], [0, 0, 1, 1], [], []>} : vector<8x8xf32>, vector<8x14xf32>, vector<8x14xf32> -> vector<8x14xf32>
    %6 = vector.extract_strided_slice %1 {offsets = [0, 1], sizes = [8, 14], strides = [1, 1]} : vector<8x16xf32> to vector<8x14xf32>
    %c1 = arith.constant 1 : index
    %c0_5 = arith.constant 0 : index
    %c0_6 = arith.constant 0 : index
    %7 = vector.load %arg2[%c1, %c0_5, %c0_6] : memref<3x8x8xf32, #tpu.memory_space<vmem>>, vector<1x8x8xf32>
    %8 = vector.shape_cast %7 : vector<1x8x8xf32> to vector<8x8xf32>
    %cst_7 = arith.constant dense<0.000000e+00> : vector<8x14xf32>
    %9 = tpu.matmul %8, %6, %cst_7 {dimension_numbers = #tpu.dot_dimension_numbers<[1], [0], [0], [1], [0, 0, 1, 1], [], []>} : vector<8x8xf32>, vector<8x14xf32>, vector<8x14xf32> -> vector<8x14xf32>
    %10 = arith.addf %5, %9 : vector<8x14xf32>
    %11 = vector.extract_strided_slice %1 {offsets = [0, 2], sizes = [8, 14], strides = [1, 1]} : vector<8x16xf32> to vector<8x14xf32>
    %c2 = arith.constant 2 : index
    %c0_8 = arith.constant 0 : index
    %c0_9 = arith.constant 0 : index
    %12 = vector.load %arg2[%c2, %c0_8, %c0_9] : memref<3x8x8xf32, #tpu.memory_space<vmem>>, vector<1x8x8xf32>
    %13 = vector.shape_cast %12 : vector<1x8x8xf32> to vector<8x8xf32>
    %cst_10 = arith.constant dense<0.000000e+00> : vector<8x14xf32>
    %14 = tpu.matmul %13, %11, %cst_10 {dimension_numbers = #tpu.dot_dimension_numbers<[1], [0], [0], [1], [0, 0, 1, 1], [], []>} : vector<8x8xf32>, vector<8x14xf32>, vector<8x14xf32> -> vector<8x14xf32>
    %15 = arith.addf %10, %14 : vector<8x14xf32>
    %c0_11 = arith.constant 0 : index
    %c0_12 = arith.constant 0 : index
    %16 = vector.load %arg3[%c0_11, %c0_12] : memref<8x1xf32, #tpu.memory_space<vmem>>, vector<8x1xf32>
    %17 = vector.broadcast %16 : vector<8x1xf32> to vector<8x14xf32>
    %18 = arith.addf %15, %17 : vector<8x14xf32>
    %cst_13 = arith.constant 0.000000e+00 : f32
    %19 = vector.broadcast %cst_13 : f32 to vector<8x14xf32>
    %20 = arith.maximumf %18, %19 : vector<8x14xf32>
    %21 = arith.addf %20, %6 : vector<8x14xf32>
    %c0_14 = arith.constant 0 : index
    %c0_15 = arith.constant 0 : index
    %c0_16 = arith.constant 0 : index
    %22 = vector.load %arg4[%c0_14, %c0_15, %c0_16] : memref<1x8x14xf32, #tpu.memory_space<vmem>>, vector<1x8x14xf32>
    %23 = vector.shape_cast %22 : vector<1x8x14xf32> to vector<8x14xf32>
    %24 = vector.shape_cast %21 : vector<8x14xf32> to vector<1x8x14xf32>
    tpu.vector_store %arg4[%c0_14, %c0_15, %c0_16], %24 {strides = array<i32>} : memref<1x8x14xf32, #tpu.memory_space<vmem>>, vector<1x8x14xf32>,
    return
  }
  func.func @transform_0(%arg0: i32) -> (i32, i32, i32) {
    %c0_i32 = arith.constant 0 : i32
    %c0_i32_0 = arith.constant 0 : i32
    %c0_i32_1 = arith.constant 0 : i32
    return %arg0, %c0_i32, %c0_i32_0 : i32, i32, i32
  }
  func.func @transform_1(%arg0: i32) -> (i32, i32, i32) {
    %c0_i32 = arith.constant 0 : i32
    %c0_i32_0 = arith.constant 0 : i32
    %c0_i32_1 = arith.constant 0 : i32
    %c0_i32_2 = arith.constant 0 : i32
    return %c0_i32, %c0_i32_0, %c0_i32_1 : i32, i32, i32
  }
  func.func @transform_2(%arg0: i32) -> (i32, i32) {
    %c0_i32 = arith.constant 0 : i32
    %c0_i32_0 = arith.constant 0 : i32
    %c0_i32_1 = arith.constant 0 : i32
    return %c0_i32, %c0_i32_0 : i32, i32
  }
  func.func @transform_3(%arg0: i32) -> (i32, i32, i32) {
    %c0_i32 = arith.constant 0 : i32
    %c0_i32_0 = arith.constant 0 : i32
    %c0_i32_1 = arith.constant 0 : i32
    return %arg0, %c0_i32, %c0_i32_0 : i32, i32, i32
  }
}

</mosaic_0001>

<llo_original>
// kernel: tpu_custom_call.1
$region0: #{tpu_custom_call.1}
  #allocation0 [shape = 'u32[]', space=smem, size = 0x4, offset = 0x4, fixed_abs, tag = 'smem constant byte address 0x4 - core index']
  #allocation1 [shape = 'u32[144,128]{1,0:T(1,128)}', space=vmem, size = 0x12000, scoped, tag = 'internal scratch']
  %s0 = inlined_call_operand.hbm [shape: f32[2,8,16], index: 0, kind: input, shape index: {}]
  %s1 = inlined_call_operand.hbm [shape: f32[3,8,8], index: 1, kind: input, shape index: {}]
  %s2 = inlined_call_operand.vmem [shape: f32[8,1], index: 2, kind: input, shape index: {}]
  %s3 = inlined_call_operand.hbm [shape: f32[2,8,14], index: 3, kind: output, shape index: {}]
  %s4 = sld [smem:[#allocation0]]
  $region53: #{tpu_custom_call.1} parent=0
    _
  %s6 = ssub.s32 1, %s4
  %s7 = scalar_select 0, %s6, %s4
  $region1: #{tpu_custom_call.1} parent=0
    #allocation2 [shape = 'u8[8192]{0}', space=vmem, size = 0x2000, scoped, tag = 'input window, operand 0']
    #allocation3 [shape = 's32[2]{0}', space=sflag, size = 0x8, scoped, tag = 'scoped memory for tpu_custom_call.1']
    #allocation4 [shape = 's32[2]{0}', space=sflag, size = 0x8, scoped, tag = 'scoped memory for tpu_custom_call.1']
    #allocation5 [shape = 'u8[12288]{0}', space=vmem, size = 0x3000, scoped, tag = 'input window, operand 1, single buffered']
    #allocation6 [shape = 's32[1]{0}', space=sflag, size = 0x4, scoped, tag = 'scoped memory for tpu_custom_call.1']
    #allocation7 [shape = 'u8[8192]{0}', space=vmem, size = 0x2000, scoped, tag = 'output window, operand 0']
    %8 = vsyncpa [#allocation3], 0
    %s9 = scalar_lea.sflag [#allocation3], 1
    %10 = vsyncpa %s9, 0
    %11 = vsyncpa [#allocation6], 0
    %12 = vsyncpa [#allocation4], 0
    %s13 = scalar_lea.sflag [#allocation4], 1
    %14 = vsyncpa %s13, 0
    loop: start=0, step=1, limit=4
    $region2: #{tpu_custom_call.1} parent=1 // loop_pre_header
      _
    $region3: #{tpu_custom_call.1} parent=1 // loop_header
      %s16 = sphi 0, %s20
      %p17 = scmp.ge.s32.totalorder %s16, 4
      %s26 = sphi 0, %s28
      %s29 = sphi 0, %s26
      %s30 = sphi 0, %s29
      %s46 = sphi 0, %s30
      %s50 = sphi 0, %s50
      %s52 = sphi 0, %s50
      %s53 = sphi 0, %s52
      %s67 = sphi 0, %s53
      %s71 = sphi 0, %s71
      %s73 = sphi 0, %s71
      %s74 = sphi 0, %s73
      %s88 = sphi 0, %s74
      %s94 = sphi 0, %s96
      %s97 = sphi 0, %s94
      %s98 = sphi 0, %s97
      %s114 = sphi 0, %s98
    $region4: #{tpu_custom_call.1} parent=1 // loop_header_branch
      %19 = sbr.rel (%p17) target = $region8
    $region5: #{tpu_custom_call.1} parent=1 // loop_body
      %s21 = ssub.s32 %s16, 1
      %s22 = ssub.s32 %s16, 2
      %s23 = sadd.s32 %s16, 1
      %s24 = ssub.s32 %s16, %s23
      %p25 = scmp.eq.s32.totalorder %s24, 0
      %s27 = sadd.s32 %s26, 1
      %s28 = scalar_select %p25, %s26, %s27
      %p31 = pneg %p25
      %p32 = scmp.eq.s32.totalorder %s16, 1
      %p33 = por %p31, %p32
      %p34 = scmp.ne.s32.totalorder %s26, %s29
      %p35 = scmp.eq.s32.totalorder %s16, 0
      %p36 = por %p34, %p35
      %p37 = scmp.ne.s32.totalorder %s26, %s29
      %p38 = scmp.eq.s32.totalorder %s21, 1
      %p39 = por %p37, %p38
      %p40 = scmp.ne.s32.totalorder %s29, %s30
      %p41 = scmp.eq.s32.totalorder %s21, 0
      %p42 = por %p40, %p41
      %p43 = scmp.ne.s32.totalorder %s29, %s30
      %p44 = scmp.eq.s32.totalorder %s22, 1
      %p45 = por %p43, %p44
      %p47 = scmp.ne.s32.totalorder %s30, %s46
      %p48 = scmp.eq.s32.totalorder %s22, 0
      %p49 = por %p47, %p48
      %s51 = sadd.s32 %s50, 1
      %p54 = scmp.eq.s32.totalorder %s16, 1
      %p55 = scmp.ne.s32.totalorder %s50, %s52
      %p56 = scmp.eq.s32.totalorder %s16, 0
      %p57 = por %p55, %p56
      %p58 = scmp.ne.s32.totalorder %s50, %s52
      %p59 = scmp.eq.s32.totalorder %s21, 1
      %p60 = por %p58, %p59
      %p61 = scmp.ne.s32.totalorder %s52, %s53
      %p62 = scmp.eq.s32.totalorder %s21, 0
      %p63 = por %p61, %p62
      %p64 = scmp.ne.s32.totalorder %s52, %s53
      %p65 = scmp.eq.s32.totalorder %s22, 1
      %p66 = por %p64, %p65
      %p68 = scmp.ne.s32.totalorder %s53, %s67
      %p69 = scmp.eq.s32.totalorder %s22, 0
      %p70 = por %p68, %p69
      %s72 = sadd.s32 %s71, 1
      %p75 = scmp.eq.s32.totalorder %s16, 1
      %p76 = scmp.ne.s32.totalorder %s71, %s73
      %p77 = scmp.eq.s32.totalorder %s16, 0
      %p78 = por %p76, %p77
      %p79 = scmp.ne.s32.totalorder %s71, %s73
      %p80 = scmp.eq.s32.totalorder %s21, 1
      %p81 = por %p79, %p80
      %p82 = scmp.ne.s32.totalorder %s73, %s74
      %p83 = scmp.eq.s32.totalorder %s21, 0
      %p84 = por %p82, %p83
      %p85 = scmp.ne.s32.totalorder %s73, %s74
      %p86 = scmp.eq.s32.totalorder %s22, 1
      %p87 = por %p85, %p86
      %p89 = scmp.ne.s32.totalorder %s74, %s88
      %p90 = scmp.eq.s32.totalorder %s22, 0
      %p91 = por %p89, %p90
      %s92 = ssub.s32 %s16, %s23
      %p93 = scmp.eq.s32.totalorder %s92, 0
      %s95 = sadd.s32 %s94, 1
      %s96 = scalar_select %p93, %s94, %s95
      %p99 = pneg %p93
      %p100 = scmp.eq.s32.totalorder %s16, 1
      %p101 = por %p99, %p100
      %p102 = scmp.ne.s32.totalorder %s94, %s97
      %p103 = scmp.eq.s32.totalorder %s16, 0
      %p104 = por %p102, %p103
      %p105 = scmp.ne.s32.totalorder %s94, %s97
      %p106 = scmp.eq.s32.totalorder %s21, 1
      %p107 = por %p105, %p106
      %p108 = scmp.ne.s32.totalorder %s97, %s98
      %p109 = scmp.eq.s32.totalorder %s21, 0
      %p110 = por %p108, %p109
      %p111 = scmp.ne.s32.totalorder %s97, %s98
      %p112 = scmp.eq.s32.totalorder %s22, 1
      %p113 = por %p111, %p112
      %p115 = scmp.ne.s32.totalorder %s98, %s114
      %p116 = scmp.eq.s32.totalorder %s22, 0
      %p117 = por %p115, %p116
      %p118 = scmp.le.s32.totalorder 1, %s16
      %p119 = scmp.lt.s32.totalorder %s16, 3
      %p120 = pnand %p118, %p119
      %p121 = pneg %p120
      // Predicated region
      $region9: #{tpu_custom_call.1} parent=5 // pred_check
        _
      $region10: #{tpu_custom_call.1} parent=5 // pred_check_branch
        %123 = sbr.rel (%p120) target = $region12
      $region11: #{tpu_custom_call.1} parent=5 // pred_region
        %s124 = ssub.s32 %s16, 1
        // Predicated region
        $region13: #{tpu_custom_call.1} parent=11 // pred_check
          %p125 = pneg %p63
        $region14: #{tpu_custom_call.1} parent=11 // pred_check_branch
          %127 = sbr.rel (%p125) target = $region16
        $region15: #{tpu_custom_call.1} parent=11 // pred_region
          %s129 = ssub.s32 384, 384
          %130 = vsyncadd [#allocation6], %s129
          %s131 = sshll.u32 [#allocation5], 4
          %s132 = int_to_ptr.vmem [resolvable:$true] %s131
          %137 = dma.hbm_to_vmem [thread:$0]  %s1, 384, %s132, [#allocation6], 128, 128, 8
        $region16: #{tpu_custom_call.1} parent=11 // pred_fallthru
          _
        // Predicated region
        $region17: #{tpu_custom_call.1} parent=11 // pred_check
          %p138 = pneg %p84
        $region18: #{tpu_custom_call.1} parent=11 // pred_check_branch
          %140 = sbr.rel (%p138) target = $region20
        $region19: #{tpu_custom_call.1} parent=11 // pred_region
          _
        $region20: #{tpu_custom_call.1} parent=11 // pred_fallthru
          _
      $region12: #{tpu_custom_call.1} parent=5 // pred_fallthru
        _
      %p141 = scmp.lt.s32.totalorder %s16, 2
      // Predicated region
      $region21: #{tpu_custom_call.1} parent=5 // pred_check
        %p142 = pneg %p141
      $region22: #{tpu_custom_call.1} parent=5 // pred_check_branch
        %144 = sbr.rel (%p142) target = $region24
      $region23: #{tpu_custom_call.1} parent=5 // pred_region
        // Predicated region
        $region25: #{tpu_custom_call.1} parent=23 // pred_check
          %p145 = pneg %p36
        $region26: #{tpu_custom_call.1} parent=23 // pred_check_branch
          %147 = sbr.rel (%p145) target = $region28
        $region27: #{tpu_custom_call.1} parent=23 // pred_region
          %s148 = sand.u32 %s26, 1
          %s149 = scalar_lea.sflag [#allocation3], %s148
          %s150 = sand.u32 %s26, 1
          %s151 = smul.addr %s150, 8
          %s152 = scalar_lea.vmem [#allocation2], %s151
          %s154 = ssub.s32 128, 128
          %155 = vsyncadd %s149, %s154
          %s156 = smul.addr %s16, 128
          %s157 = scalar_lea.hbm %s0, %s156
          %s159 = sshll.u32 %s152, 4
          %s160 = int_to_ptr.vmem [resolvable:$true] %s159
          %162 = dma.hbm_to_vmem [thread:$0]  %s157, 128, %s160, %s149
        $region28: #{tpu_custom_call.1} parent=23 // pred_fallthru
          _
      $region24: #{tpu_custom_call.1} parent=5 // pred_fallthru
        _
      %p163 = scmp.le.s32.totalorder 1, %s16
      %p164 = scmp.lt.s32.totalorder %s16, 3
      %p165 = pnand %p163, %p164
      %p166 = pneg %p165
      // Predicated region
      $region29: #{tpu_custom_call.1} parent=5 // pred_check
        _
      $region30: #{tpu_custom_call.1} parent=5 // pred_check_branch
        %168 = sbr.rel (%p165) target = $region32
      $region31: #{tpu_custom_call.1} parent=5 // pred_region
        %s169 = ssub.s32 %s16, 1
        %s170 = sand.u32 %s29, 1
        %s171 = scalar_lea.sflag [#allocation3], %s170
        %s172 = sand.u32 %s29, 1
        %s173 = smul.addr %s172, 8
        %s174 = scalar_lea.vmem [#allocation2], %s173
        // Predicated region
        $region33: #{tpu_custom_call.1} parent=31 // pred_check
          %p175 = pneg %p42
        $region34: #{tpu_custom_call.1} parent=31 // pred_check_branch
          %177 = sbr.rel (%p175) target = $region36
        $region35: #{tpu_custom_call.1} parent=31 // pred_region
          %178 = dma.done %s171, 128
        $region36: #{tpu_custom_call.1} parent=31 // pred_fallthru
          _
        // Predicated region
        $region37: #{tpu_custom_call.1} parent=31 // pred_check
          %p179 = pneg %p63
        $region38: #{tpu_custom_call.1} parent=31 // pred_check_branch
          %181 = sbr.rel (%p179) target = $region40
        $region39: #{tpu_custom_call.1} parent=31 // pred_region
          %182 = dma.done [#allocation6], 384
        $region40: #{tpu_custom_call.1} parent=31 // pred_fallthru
          _
        %s183 = sand.u32 %s29, 1
        %s184 = scalar_lea.sflag [#allocation3], %s183
        %s185 = sand.u32 %s29, 1
        %s186 = smul.addr %s185, 8
        %s187 = scalar_lea.vmem [#allocation2], %s186
        %p188 = pneg %p42
        %p189 = pneg %p39
        %p190 = pneg %p63
        %p191 = pneg %p60
        %p192 = pneg %p84
        %p193 = pneg %p81
        %p194 = pneg %p110
        %p195 = pneg %p107
        %s196 = sand.u32 %s97, 1
        %s197 = scalar_lea.sflag [#allocation4], %s196
        %s198 = sand.u32 %s97, 1
        %s199 = smul.addr %s198, 8
        %s200 = scalar_lea.vmem [#allocation7], %s199
        %v201 = vld [vmem:[%s174] sm:$0xff]
        %v202 = vld [vmem:[#allocation5] sm:$0xff]
        %s203 = scalar_lea.vmem [#allocation5], 8
        %v204 = vld [vmem:[%s203] sm:$0xff]
        %206 = vrot.lane.b32.xlu0 %v201, 127
        %v207 = vpop.permute.xlu0 %206
        %vm209 = vcmask 64512
        %v211 = vsel %vm209, %v204, 0
        %213 = vmatprep.subr.mxu0 0.0
        %214 = vmatpush1.msra.mxu0 0.0
        %215 = vmatprep.subr.mxu0 0.0
        %216 = vmatpush1.msra.mxu0 0.0
        %217 = vmatprep.subr.mxu0 0.0
        %218 = vmatpush1.msra.mxu0 0.0
        %219 = vmatprep.subr.mxu0 0.0
        %220 = vmatpush1.msra.mxu0 0.0
        %221 = vmatprep.subr.mxu0 0.0
        %222 = vmatpush1.msra.mxu0 0.0
        %223 = vmatprep.subr.mxu0 0.0
        %224 = vmatpush1.msra.mxu0 0.0
        %225 = vmatprep.subr.mxu0 0.0
        %226 = vmatpush1.msra.mxu0 0.0
        %227 = vmatprep.subr.mxu0 0.0
        %228 = vmatpush1.msra.mxu0 0.0
        %229 = vmatprep.subr.mxu0 0.0
        %230 = vmatpush1.msra.mxu0 0.0
        %231 = vmatprep.subr.mxu0 0.0
        %232 = vmatpush1.msra.mxu0 0.0
        %233 = vmatprep.subr.mxu0 0.0
        %234 = vmatpush1.msra.mxu0 0.0
        %235 = vmatprep.subr.mxu0 0.0
        %236 = vmatpush1.msra.mxu0 0.0
        %237 = vmatprep.subr.mxu0 0.0
        %238 = vmatpush1.msra.mxu0 0.0
        %239 = vmatprep.subr.mxu0 0.0
        %240 = vmatpush1.msra.mxu0 0.0
        %241 = vmatprep.subr.mxu0 0.0
        %242 = vmatpush1.msra.mxu0 0.0
        %243 = vmatprep.subr.mxu0 0.0
        %244 = vmatpush1.msra.mxu0 %v207
        %245 = vmatprep.subr.mxu0 0.0
        %246 = vmatpush2.msra.mxu0 0.0
        %247 = vmatprep.subr.mxu0 0.0
        %248 = vmatpush2.msra.mxu0 0.0
        %249 = vmatprep.subr.mxu0 0.0
        %250 = vmatpush2.msra.mxu0 0.0
        %251 = vmatprep.subr.mxu0 0.0
        %252 = vmatpush2.msra.mxu0 0.0
        %253 = vmatprep.subr.mxu0 0.0
        %254 = vmatpush2.msra.mxu0 0.0
        %255 = vmatprep.subr.mxu0 0.0
        %256 = vmatpush2.msra.mxu0 0.0
        %257 = vmatprep.subr.mxu0 0.0
        %258 = vmatpush2.msra.mxu0 0.0
        %259 = vmatprep.subr.mxu0 0.0
        %260 = vmatpush2.msra.mxu0 0.0
        %261 = vmatprep.subr.mxu0 0.0
        %262 = vmatpush2.msra.mxu0 0.0
        %263 = vmatprep.subr.mxu0 0.0
        %264 = vmatpush2.msra.mxu0 0.0
        %265 = vmatprep.subr.mxu0 0.0
        %266 = vmatpush2.msra.mxu0 0.0
        %267 = vmatprep.subr.mxu0 0.0
        %268 = vmatpush2.msra.mxu0 0.0
        %269 = vmatprep.subr.mxu0 0.0
        %270 = vmatpush2.msra.mxu0 0.0
        %271 = vmatprep.subr.mxu0 0.0
        %272 = vmatpush2.msra.mxu0 0.0
        %273 = vmatprep.subr.mxu0 0.0
        %274 = vmatpush2.msra.mxu0 0.0
        %275 = vmatprep.subr.mxu0 0.0
        %276 = vmatpush2.msra.mxu0 0.0
        %277 = vmatprep.mubr.f32.mxu0 0.0
        %278 = vmatmul.mubr.f32.gmra.mxu0 %v211
        %v279 = vpop.f32.mrf.mxu0
        %v280 = vadd.f32 0.0, %v279
        %v281 = vpop.f32.mrf.mxu0
        %282 = vdwg.mxu0
        %v284 = vsel %vm209, %v202, 0
        %286 = vmatprep.subr.mxu0 0.0
        %287 = vmatpush1.msra.mxu0 0.0
        %288 = vmatprep.subr.mxu0 0.0
        %289 = vmatpush1.msra.mxu0 0.0
        %290 = vmatprep.subr.mxu0 0.0
        %291 = vmatpush1.msra.mxu0 0.0
        %292 = vmatprep.subr.mxu0 0.0
        %293 = vmatpush1.msra.mxu0 0.0
        %294 = vmatprep.subr.mxu0 0.0
        %295 = vmatpush1.msra.mxu0 0.0
        %296 = vmatprep.subr.mxu0 0.0
        %297 = vmatpush1.msra.mxu0 0.0
        %298 = vmatprep.subr.mxu0 0.0
        %299 = vmatpush1.msra.mxu0 0.0
        %300 = vmatprep.subr.mxu0 0.0
        %301 = vmatpush1.msra.mxu0 0.0
        %302 = vmatprep.subr.mxu0 0.0
        %303 = vmatpush1.msra.mxu0 0.0
        %304 = vmatprep.subr.mxu0 0.0
        %305 = vmatpush1.msra.mxu0 0.0
        %306 = vmatprep.subr.mxu0 0.0
        %307 = vmatpush1.msra.mxu0 0.0
        %308 = vmatprep.subr.mxu0 0.0
        %309 = vmatpush1.msra.mxu0 0.0
        %310 = vmatprep.subr.mxu0 0.0
        %311 = vmatpush1.msra.mxu0 0.0
        %312 = vmatprep.subr.mxu0 0.0
        %313 = vmatpush1.msra.mxu0 0.0
        %314 = vmatprep.subr.mxu0 0.0
        %315 = vmatpush1.msra.mxu0 0.0
        %316 = vmatprep.subr.mxu0 0.0
        %317 = vmatpush1.msra.mxu0 %v201
        %318 = vmatprep.subr.mxu0 0.0
        %319 = vmatpush2.msra.mxu0 0.0
        %320 = vmatprep.subr.mxu0 0.0
        %321 = vmatpush2.msra.mxu0 0.0
        %322 = vmatprep.subr.mxu0 0.0
        %323 = vmatpush2.msra.mxu0 0.0
        %324 = vmatprep.subr.mxu0 0.0
        %325 = vmatpush2.msra.mxu0 0.0
        %326 = vmatprep.subr.mxu0 0.0
        %327 = vmatpush2.msra.mxu0 0.0
        %328 = vmatprep.subr.mxu0 0.0
        %329 = vmatpush2.msra.mxu0 0.0
        %330 = vmatprep.subr.mxu0 0.0
        %331 = vmatpush2.msra.mxu0 0.0
        %332 = vmatprep.subr.mxu0 0.0
        %333 = vmatpush2.msra.mxu0 0.0
        %334 = vmatprep.subr.mxu0 0.0
        %335 = vmatpush2.msra.mxu0 0.0
        %336 = vmatprep.subr.mxu0 0.0
        %337 = vmatpush2.msra.mxu0 0.0
        %338 = vmatprep.subr.mxu0 0.0
        %339 = vmatpush2.msra.mxu0 0.0
        %340 = vmatprep.subr.mxu0 0.0
        %341 = vmatpush2.msra.mxu0 0.0
        %342 = vmatprep.subr.mxu0 0.0
        %343 = vmatpush2.msra.mxu0 0.0
        %344 = vmatprep.subr.mxu0 0.0
        %345 = vmatpush2.msra.mxu0 0.0
        %346 = vmatprep.subr.mxu0 0.0
        %347 = vmatpush2.msra.mxu0 0.0
        %348 = vmatprep.subr.mxu0 0.0
        %349 = vmatpush2.msra.mxu0 0.0
        %350 = vmatprep.mubr.f32.mxu0 0.0
        %351 = vmatmul.mubr.f32.gmra.mxu0 %v284
        %v352 = vpop.f32.mrf.mxu0
        %v353 = vadd.f32 %v280, %v352
        %v354 = vpop.f32.mrf.mxu0
        %355 = vdwg.mxu0
        %s356 = scalar_lea.vmem [#allocation5], 16
        %v357 = vld [vmem:[%s356] sm:$0xff]
        %358 = vrot.lane.b32.xlu0 %v201, 126
        %v359 = vpop.permute.xlu0 %358
        %v362 = vsel %vm209, %v357, 0
        %364 = vmatprep.subr.mxu0 0.0
        %365 = vmatpush1.msra.mxu0 0.0
        %366 = vmatprep.subr.mxu0 0.0
        %367 = vmatpush1.msra.mxu0 0.0
        %368 = vmatprep.subr.mxu0 0.0
        %369 = vmatpush1.msra.mxu0 0.0
        %370 = vmatprep.subr.mxu0 0.0
        %371 = vmatpush1.msra.mxu0 0.0
        %372 = vmatprep.subr.mxu0 0.0
        %373 = vmatpush1.msra.mxu0 0.0
        %374 = vmatprep.subr.mxu0 0.0
        %375 = vmatpush1.msra.mxu0 0.0
        %376 = vmatprep.subr.mxu0 0.0
        %377 = vmatpush1.msra.mxu0 0.0
        %378 = vmatprep.subr.mxu0 0.0
        %379 = vmatpush1.msra.mxu0 0.0
        %380 = vmatprep.subr.mxu0 0.0
        %381 = vmatpush1.msra.mxu0 0.0
        %382 = vmatprep.subr.mxu0 0.0
        %383 = vmatpush1.msra.mxu0 0.0
        %384 = vmatprep.subr.mxu0 0.0
        %385 = vmatpush1.msra.mxu0 0.0
        %386 = vmatprep.subr.mxu0 0.0
        %387 = vmatpush1.msra.mxu0 0.0
        %388 = vmatprep.subr.mxu0 0.0
        %389 = vmatpush1.msra.mxu0 0.0
        %390 = vmatprep.subr.mxu0 0.0
        %391 = vmatpush1.msra.mxu0 0.0
        %392 = vmatprep.subr.mxu0 0.0
        %393 = vmatpush1.msra.mxu0 0.0
        %394 = vmatprep.subr.mxu0 0.0
        %395 = vmatpush1.msra.mxu0 %v359
        %396 = vmatprep.subr.mxu0 0.0
        %397 = vmatpush2.msra.mxu0 0.0
        %398 = vmatprep.subr.mxu0 0.0
        %399 = vmatpush2.msra.mxu0 0.0
        %400 = vmatprep.subr.mxu0 0.0
        %401 = vmatpush2.msra.mxu0 0.0
        %402 = vmatprep.subr.mxu0 0.0
        %403 = vmatpush2.msra.mxu0 0.0
        %404 = vmatprep.subr.mxu0 0.0
        %405 = vmatpush2.msra.mxu0 0.0
        %406 = vmatprep.subr.mxu0 0.0
        %407 = vmatpush2.msra.mxu0 0.0
        %408 = vmatprep.subr.mxu0 0.0
        %409 = vmatpush2.msra.mxu0 0.0
        %410 = vmatprep.subr.mxu0 0.0
        %411 = vmatpush2.msra.mxu0 0.0
        %412 = vmatprep.subr.mxu0 0.0
        %413 = vmatpush2.msra.mxu0 0.0
        %414 = vmatprep.subr.mxu0 0.0
        %415 = vmatpush2.msra.mxu0 0.0
        %416 = vmatprep.subr.mxu0 0.0
        %417 = vmatpush2.msra.mxu0 0.0
        %418 = vmatprep.subr.mxu0 0.0
        %419 = vmatpush2.msra.mxu0 0.0
        %420 = vmatprep.subr.mxu0 0.0
        %421 = vmatpush2.msra.mxu0 0.0
        %422 = vmatprep.subr.mxu0 0.0
        %423 = vmatpush2.msra.mxu0 0.0
        %424 = vmatprep.subr.mxu0 0.0
        %425 = vmatpush2.msra.mxu0 0.0
        %426 = vmatprep.subr.mxu0 0.0
        %427 = vmatpush2.msra.mxu0 0.0
        %428 = vmatprep.mubr.f32.mxu0 0.0
        %429 = vmatmul.mubr.f32.gmra.mxu0 %v362
        %v430 = vpop.f32.mrf.mxu0
        %v431 = vadd.f32 0.0, %v430
        %v432 = vpop.f32.mrf.mxu0
        %433 = vdwg.mxu0
        %v434 = vadd.f32 %v353, %v431
        %v435 = vld [vmem:[%s2] sm:$0xff]
        %437 = vset.pattern.permute.xlu0 0
        %438 = vperm.xlu0 %437, %v435
        %v439 = vpop.permute.xlu0 %438
        %v441 = vadd.f32 %v434, %v439
        %v442 = vmax.f32 %v441, 0.0
        %v443 = vadd.f32 %v442, %v207
        %vm444 = vcmask 113664
        %445 = vst.msk [vmem:[%s200] sm:$0xff] %vm444, %v443
        %s446 = sand.u32 %s97, 1
        %s447 = scalar_lea.sflag [#allocation4], %s446
        %s448 = sand.u32 %s97, 1
        %s449 = smul.addr %s448, 8
        %s450 = scalar_lea.vmem [#allocation7], %s449
        // Predicated region
        $region41: #{tpu_custom_call.1} parent=31 // pred_check
          %p451 = pneg %p107
        $region42: #{tpu_custom_call.1} parent=31 // pred_check_branch
          %453 = sbr.rel (%p451) target = $region44
        $region43: #{tpu_custom_call.1} parent=31 // pred_region
          %s455 = ssub.s32 128, 128
          %456 = vsyncadd %s447, %s455
          %s457 = smul.addr %s21, 128
          %s458 = scalar_lea.hbm %s3, %s457
          %s460 = sshll.u32 %s450, 4
          %s461 = int_to_ptr.vmem [resolvable:$true] %s460
          %463 = dma.vmem_to_hbm [thread:$0]  %s461, 128, %s458, %s447
        $region44: #{tpu_custom_call.1} parent=31 // pred_fallthru
          _
      $region32: #{tpu_custom_call.1} parent=5 // pred_fallthru
        _
      %p464 = scmp.le.s32.totalorder 2, %s16
      // Predicated region
      $region45: #{tpu_custom_call.1} parent=5 // pred_check
        %p465 = pneg %p464
      $region46: #{tpu_custom_call.1} parent=5 // pred_check_branch
        %467 = sbr.rel (%p465) target = $region48
      $region47: #{tpu_custom_call.1} parent=5 // pred_region
        %s468 = ssub.s32 %s16, 2
        // Predicated region
        $region49: #{tpu_custom_call.1} parent=47 // pred_check
          %p469 = pneg %p113
        $region50: #{tpu_custom_call.1} parent=47 // pred_check_branch
          %471 = sbr.rel (%p469) target = $region52
        $region51: #{tpu_custom_call.1} parent=47 // pred_region
          %s472 = sand.u32 %s98, 1
          %s473 = scalar_lea.sflag [#allocation4], %s472
          %s474 = sand.u32 %s98, 1
          %s475 = smul.addr %s474, 8
          %s476 = scalar_lea.vmem [#allocation7], %s475
          %477 = dma.done %s473, 128
        $region52: #{tpu_custom_call.1} parent=47 // pred_fallthru
          _
      $region48: #{tpu_custom_call.1} parent=5 // pred_fallthru
        _
    $region6: #{tpu_custom_call.1} parent=1 // loop_footer
      %s20 = sadd.s32 1, %s16
    $region7: #{tpu_custom_call.1} parent=1 // loop_footer_branch
      %15 = sbr.rel target = $region3
    $region8: #{tpu_custom_call.1} parent=1 // loop_exit
      _
    %478 = vsyncpa [#allocation3], 1
    %s479 = scalar_lea.sflag [#allocation3], 1
    %480 = vsyncpa %s479, 1
    %481 = vsyncpa [#allocation6], 1
    %482 = vsyncpa [#allocation4], 1
    %s483 = scalar_lea.sflag [#allocation4], 1
    %484 = vsyncpa %s483, 1

</llo_original>
